<compile_context>
chip_gen: v6e
topology: v6e:2x2x1
jax: 0.10.0
libtpu: 0.0.40
codegen_flags: <defaults>
</compile_context>

<pallas_src>
import functools

import jax
import jax.numpy as jnp
from jax.experimental import pallas as pl
from jax.experimental.pallas import tpu as pltpu


def _cdiv(a, b):
    return -(-a // b)


def _round_up(a, b):
    return _cdiv(a, b) * b


def _round_down(a, b):
    return (a // b) * b


def _tpu_params():
    """(vmem_limit_bytes, num_tensorcores) — generation-aware, safe fallback."""
    vmem_phys = 64 * 1024 * 1024   # conservative default (v7x physical)
    cores = 1
    try:
        info = pltpu.get_tpu_info()
        v = getattr(info, "vmem_capacity_bytes", None)
        if v:
            vmem_phys = int(v)
        for name in ("num_cores", "core_count", "num_tensorcores"):
            c = getattr(info, name, None)
            if c:
                cores = max(1, int(c))
                break
    except Exception:
        pass
    # Target ~60-65% of physical VMEM for the scoped limit (40 MiB on v7x,
    # 80 MiB on 128-MiB parts), leaving headroom for compiler scratch.
    vmem_limit = max(16 * 1024 * 1024, (vmem_phys * 5) // 8)
    return vmem_limit, cores


# --------------------------------------------------------------------------
# Path 1: whole spatial extent per block (one grid axis over instance rows).
# --------------------------------------------------------------------------
def _adain_rows_kernel(c_ref, s_ref, o_ref, *, style_weight, eps, inv_hw, bessel):
    # c_ref/s_ref/o_ref: (tile_rows, HW) tiles in VMEM; one instance per row.
    c = c_ref[...].astype(jnp.float32)
    s = s_ref[...].astype(jnp.float32)

    # Two-pass (centered) statistics — tile is already resident in VMEM,
    # kernel is HBM-bound, so the extra VALU/XLU work is free.
    c_mean = jnp.sum(c, axis=-1, keepdims=True) * inv_hw
    s_mean = jnp.sum(s, axis=-1, keepdims=True) * inv_hw
    c_cen = c - c_mean
    s_cen = s - s_mean
    c_var = jnp.sum(c_cen * c_cen, axis=-1, keepdims=True) * bessel   # unbiased
    s_var = jnp.sum(s_cen * s_cen, axis=-1, keepdims=True) * bessel
    c_std = jnp.sqrt(c_var)
    s_std = jnp.sqrt(s_var)

    # Exact per-row division (matches PyTorch's / (std + eps)); per-row vector
    # only, so it costs nothing in an HBM-bound kernel.
    k = s_std / (c_std + eps)
    a = (1.0 - style_weight) + style_weight * k
    b = style_weight * (s_mean - c_mean * k)

    # Fused epilogue: out = A * c + B.
    o_ref[...] = (a * c + b).astype(o_ref.dtype)


def _adain_rows(cf, sf, rows, hw, style_weight, eps, row_tile,
                vmem_limit, num_cores):
    itemsize = jnp.dtype(cf.dtype).itemsize
    budget = int(0.8 * vmem_limit)
    # 6 double-buffered pipeline buffers (2 inputs + 1 output) + ~3 tile-sized
    # f32 temporaries inside the kernel.
    per_row_bytes = hw * (6 * itemsize + 12)
    cap = max(8, min(2048, _round_down(max(budget // per_row_bytes, 8), 8)))

    if rows < 8:
        tile = rows                                  # full-dim exemption
    else:
        full8 = _round_down(rows, 8)                 # largest multiple of 8 <= rows
        if row_tile is not None:
            tile = max(8, min(_round_down(max(row_tile, 8), 8), full8))
        else:
            tile = max(8, min(cap, full8))
        # Megacore: only shrink to manufacture blocks when >1 TensorCore.
        if num_cores > 1 and _cdiv(rows, tile) < num_cores and rows >= 8 * num_cores:
            tile = max(8, _round_up(_cdiv(rows, num_cores), 8))

    grid = (_cdiv(rows, tile),)   # last block may overhang: garbage rows are
    #                               computed but never written back.

    kernel = functools.partial(
        _adain_rows_kernel,
        style_weight=float(style_weight), eps=float(eps),
        inv_hw=1.0 / hw, bessel=1.0 / (hw - 1))

    cost = pl.CostEstimate(
        flops=int(8 * rows * hw),
        transcendentals=int(2 * rows),
        bytes_accessed=int(3 * rows * hw * itemsize))

    return pl.pallas_call(
        kernel,
        out_shape=jax.ShapeDtypeStruct((rows, hw), cf.dtype),
        grid_spec=pltpu.PrefetchScalarGridSpec(
            num_scalar_prefetch=0,
            grid=grid,
            in_specs=[
                pl.BlockSpec((tile, hw), lambda i: (i, 0)),
                pl.BlockSpec((tile, hw), lambda i: (i, 0)),
            ],
            out_specs=pl.BlockSpec((tile, hw), lambda i: (i, 0)),
        ),
        compiler_params=pltpu.CompilerParams(
            dimension_semantics=("parallel",),
            vmem_limit_bytes=int(vmem_limit),
        ),
        cost_estimate=cost,
    )(cf, sf)


# --------------------------------------------------------------------------
# Path 2: large H*W — two-phase grid (accumulate stats, then apply), so the
# VMEM footprint is independent of the spatial size.
# --------------------------------------------------------------------------
def _adain_hw_tiled_kernel(c_ref, s_ref, o_ref,
                           c_sum, c_ssq, s_sum, s_ssq, a_sc, b_sc,
                           *, style_weight, eps, hw_total, mask_cols):
    p = pl.program_id(1)   # phase: 0 = accumulate statistics, 1 = apply
    j = pl.program_id(2)   # spatial tile index
    hw_t = c_ref.shape[-1]

    @pl.when((p == 0) & (j == 0))
    def _init():
        c_sum[...] = jnp.zeros_like(c_sum)
        c_ssq[...] = jnp.zeros_like(c_ssq)
        s_sum[...] = jnp.zeros_like(s_sum)
        s_ssq[...] = jnp.zeros_like(s_ssq)

    @pl.when(p == 0)
    def _accumulate():
        c = c_ref[...].astype(jnp.float32)
        s = s_ref[...].astype(jnp.float32)
        if mask_cols:
            # Last spatial tile overhangs the array: zero out-of-bounds lanes
            # so they cannot corrupt the per-row sums.
            col = jax.lax.broadcasted_iota(jnp.int32, c.shape, 1) + j * hw_t
            valid = col < hw_total
            c = jnp.where(valid, c, 0.0)
            s = jnp.where(valid, s, 0.0)
        c_sum[...] += jnp.sum(c, axis=-1, keepdims=True)
        c_ssq[...] += jnp.sum(c * c, axis=-1, keepdims=True)
        s_sum[...] += jnp.sum(s, axis=-1, keepdims=True)
        s_ssq[...] += jnp.sum(s * s, axis=-1, keepdims=True)

    @pl.when((p == 1) & (j == 0))
    def _finalize():
        inv_hw = 1.0 / hw_total
        bessel = 1.0 / (hw_total - 1)          # torch.std: unbiased
        c_mean = c_sum[...] * inv_hw
        s_mean = s_sum[...] * inv_hw
        c_var = jnp.maximum(c_ssq[...] - c_sum[...] * c_mean, 0.0) * bessel
        s_var = jnp.maximum(s_ssq[...] - s_sum[...] * s_mean, 0.0) * bessel
        c_std = jnp.sqrt(c_var)
        s_std = jnp.sqrt(s_var)
        k = s_std / (c_std + eps)              # exact division
        a_sc[...] = (1.0 - style_weight) + style_weight * k
        b_sc[...] = style_weight * (s_mean - c_mean * k)

    @pl.when(p == 1)
    def _apply():
        c = c_ref[...].astype(jnp.float32)
        o_ref[...] = (a_sc[...] * c + b_sc[...]).astype(o_ref.dtype)


def _adain_hw_split(cf, sf, rows, hw, style_weight, eps, row_tile, hw_tile,
                    vmem_limit, num_cores):
    itemsize = jnp.dtype(cf.dtype).itemsize
    budget = int(0.8 * vmem_limit)

    if rows < 8:
        tile_r = rows
    elif row_tile is not None:
        tile_r = max(8, min(_round_down(max(row_tile, 8), 8), _round_down(rows, 8)))
    else:
        tile_r = 8   # small row tile: keeps both v7x cores busy and hw tiles big

    # Spatial tile: multiple of 128, sized so 6 pipeline buffers + ~2 f32
    # temporaries fit the budget.
    per_elem = 6 * itemsize + 8
    if hw_tile is not None:
        hw_t = max(128, _round_down(hw_tile, 128))
    else:
        hw_t = max(128, _round_down(max(budget // (tile_r * per_elem), 128), 128))
    hw_t = min(hw_t, _round_up(hw, 128))

    n_hw = _cdiv(hw, hw_t)
    mask_cols = (hw % hw_t) != 0
    grid = (_cdiv(rows, tile_r), 2, n_hw)

    kernel = functools.partial(
        _adain_hw_tiled_kernel,
        style_weight=float(style_weight), eps=float(eps),
        hw_total=hw, mask_cols=mask_cols)

    cost = pl.CostEstimate(
        flops=int(10 * rows * hw),
        transcendentals=int(2 * rows),
        bytes_accessed=int(4 * rows * hw * itemsize))

    return pl.pallas_call(
        kernel,
        out_shape=jax.ShapeDtypeStruct((rows, hw), cf.dtype),
        grid_spec=pltpu.PrefetchScalarGridSpec(
            num_scalar_prefetch=0,
            grid=grid,
            in_specs=[
                # content is needed in both phases
                pl.BlockSpec((tile_r, hw_t), lambda i, p, j: (i, j)),
                # style only matters in phase 0; keep its block pinned at the
                # last spatial tile during phase 1 (no extra fetch)
                pl.BlockSpec((tile_r, hw_t),
                             lambda i, p, j: (i, j * (1 - p) + (n_hw - 1) * p)),
            ],
            # output block stays parked at (i, 0) during phase 0 (never flushed
            # unwritten) and is written tile-by-tile in phase 1
            out_specs=pl.BlockSpec((tile_r, hw_t), lambda i, p, j: (i, j * p)),
            scratch_shapes=[pltpu.VMEM((tile_r, 1), jnp.float32)] * 6,
        ),
        compiler_params=pltpu.CompilerParams(
            dimension_semantics=("parallel", "arbitrary", "arbitrary"),
            vmem_limit_bytes=int(vmem_limit),
        ),
        cost_estimate=cost,
    )(cf, sf)


# --------------------------------------------------------------------------
# Public wrapper.
# --------------------------------------------------------------------------
def adain(content, style, style_weight=1.0, eps=1e-5, *,
          row_tile=None, hw_tile=None):
    """AdaIN forward. content, style: (N, C, H, W). Returns (N, C, H, W)."""
    n, c, h, w = content.shape
    assert style.shape == content.shape
    rows, hw = n * c, h * w
    assert hw > 1, "AdaIN needs H*W > 1 (unbiased std divides by HW - 1)"

    cf = content.reshape(rows, hw)
    sf = style.reshape(rows, hw)
    itemsize = jnp.dtype(content.dtype).itemsize

    vmem_limit, num_cores = _tpu_params()
    budget = int(0.8 * vmem_limit)
    per_row_bytes = hw * (6 * itemsize + 12)
    # Two-phase path only when even a minimal 8-row tile of the single-pass
    # path would overflow the VMEM budget (or when explicitly requested).
    use_split = (hw_tile is not None) or (8 * per_row_bytes > budget)

    if use_split and hw >= 256:
        out_flat = _adain_hw_split(cf, sf, rows, hw, style_weight, eps,
                                   row_tile, hw_tile, vmem_limit, num_cores)
    else:
        out_flat = _adain_rows(cf, sf, rows, hw, style_weight, eps,
                               row_tile, vmem_limit, num_cores)
    return out_flat.reshape(n, c, h, w)


def _adain_ref(content, style, style_weight=1.0, eps=1e-5):
    # Pure-JAX reference mirroring the PyTorch module (unbiased std).
    n, c, h, w = content.shape
    cf = content.reshape(n, c, -1)
    sf = style.reshape(n, c, -1)
    c_mean = jnp.mean(cf, axis=2, keepdims=True)
    s_mean = jnp.mean(sf, axis=2, keepdims=True)
    c_std = jnp.std(cf, axis=2, keepdims=True, ddof=1)
    s_std = jnp.std(sf, axis=2, keepdims=True, ddof=1)
    norm = (cf - c_mean) / (c_std + eps)
    stylized = (norm * s_std + s_mean).reshape(n, c, h, w)
    return (1.0 - style_weight) * content + style_weight * stylized


if __name__ == "__main__":
    key = jax.random.PRNGKey(0)
    k1, k2, k3, k4 = jax.random.split(key, 4)

    # 1) Small shape, rows-tiled path.
    n, c, h, w = 2, 4, 16, 16
    content = jax.random.normal(k1, (n, c, h, w), dtype=jnp.float32)
    style = jax.random.normal(k2, (n, c, h, w), dtype=jnp.float32) * 2.0 + 0.5
    out = jax.block_until_ready(adain(content, style, style_weight=0.7, eps=1e-5))
    ref = _adain_ref(content, style, style_weight=0.7, eps=1e-5)
    assert out.shape == (n, c, h, w)
    assert jnp.allclose(out, ref, atol=1e-3, rtol=1e-3), "rows-path mismatch"

    # 2) rows < 8 (full-dim row block, no padding).
    c_in2 = jax.random.normal(k3, (1, 3, 16, 16), dtype=jnp.float32)
    s_in2 = jax.random.normal(k4, (1, 3, 16, 16), dtype=jnp.float32) * 1.5 - 0.25
    out2 = jax.block_until_ready(adain(c_in2, s_in2, style_weight=1.0, eps=1e-5))
    ref2 = _adain_ref(c_in2, s_in2, style_weight=1.0, eps=1e-5)
    assert jnp.allclose(out2, ref2, atol=1e-3, rtol=1e-3), "small-rows mismatch"

    # 3) rows = 10: overhanging last row block on the rows path (no pad/slice).
    c_in2b = jax.random.normal(k1, (2, 5, 16, 16), dtype=jnp.float32)
    s_in2b = jax.random.normal(k2, (2, 5, 16, 16), dtype=jnp.float32) * 0.5 + 1.0
    out2b = jax.block_until_ready(adain(c_in2b, s_in2b, style_weight=0.3, eps=1e-5))
    ref2b = _adain_ref(c_in2b, s_in2b, style_weight=0.3, eps=1e-5)
    assert jnp.allclose(out2b, ref2b, atol=1e-3, rtol=1e-3), "row-overhang mismatch"

    # 4) Force the two-phase HW-tiled path (large-image code path) on a small shape.
    c_in3 = jax.random.normal(k1, (2, 8, 32, 64), dtype=jnp.float32)
    s_in3 = jax.random.normal(k2, (2, 8, 32, 64), dtype=jnp.float32) * 2.0 + 0.5
    out3 = jax.block_until_ready(
        adain(c_in3, s_in3, style_weight=0.7, eps=1e-5, row_tile=8, hw_tile=512))
    ref3 = _adain_ref(c_in3, s_in3, style_weight=0.7, eps=1e-5)
    assert jnp.allclose(out3, ref3, atol=1e-3, rtol=1e-3), "hw-tiled path mismatch"

    # 5) Two-phase path with a non-divisible spatial extent (exercises lane masking).
    c_in4 = jax.random.normal(k3, (1, 5, 24, 20), dtype=jnp.float32)
    s_in4 = jax.random.normal(k4, (1, 5, 24, 20), dtype=jnp.float32) * 1.3 + 0.2
    out4 = jax.block_until_ready(
        adain(c_in4, s_in4, style_weight=0.9, eps=1e-5, hw_tile=256))
    ref4 = _adain_ref(c_in4, s_in4, style_weight=0.9, eps=1e-5)
    assert jnp.allclose(out4, ref4, atol=1e-3, rtol=1e-3), "hw-mask path mismatch"

    print("KERNEL_OK")
</pallas_src>

<mosaic_0001>
module attributes {stable_mosaic.version = 11 : i64} {
  func.func @_adain_rows_kernel(%arg0: i32, %arg1: memref<8x256xf32, #tpu.memory_space<vmem>>, %arg2: memref<8x256xf32, #tpu.memory_space<vmem>>, %arg3: memref<8x256xf32, #tpu.memory_space<vmem>>) attributes {dimension_semantics = [#tpu.dimension_semantics<parallel>], iteration_bounds = array<i64: 1>, scalar_prefetch = 0 : i64, scratch_operands = 0 : i64, tpu.core_type = #tpu.core_type<tc>, window_params = [{transform_indices = @transform_0, window_bounds = array<i64: 8, 256>}, {transform_indices = @transform_1, window_bounds = array<i64: 8, 256>}, {transform_indices = @transform_2, window_bounds = array<i64: 8, 256>}]} {
    %c0 = arith.constant 0 : index
    %c0_0 = arith.constant 0 : index
    %0 = vector.load %arg1[%c0, %c0_0] : memref<8x256xf32, #tpu.memory_space<vmem>>, vector<8x256xf32>
    %c0_1 = arith.constant 0 : index
    %c0_2 = arith.constant 0 : index
    %1 = vector.load %arg2[%c0_1, %c0_2] : memref<8x256xf32, #tpu.memory_space<vmem>>, vector<8x256xf32>
    %cst = arith.constant dense<0.000000e+00> : vector<8xf32>
    %2 = vector.multi_reduction <add>, %0, %cst [1] : vector<8x256xf32> to vector<8xf32>
    %3 = vector.shape_cast %2 : vector<8xf32> to vector<8x1xf32>
    %cst_3 = arith.constant 3.906250e-03 : f32
    %4 = vector.broadcast %cst_3 : f32 to vector<8x1xf32>
    %5 = arith.mulf %3, %4 : vector<8x1xf32>
    %cst_4 = arith.constant dense<0.000000e+00> : vector<8xf32>
    %6 = vector.multi_reduction <add>, %1, %cst_4 [1] : vector<8x256xf32> to vector<8xf32>
    %7 = vector.shape_cast %6 : vector<8xf32> to vector<8x1xf32>
    %cst_5 = arith.constant 3.906250e-03 : f32
    %8 = vector.broadcast %cst_5 : f32 to vector<8x1xf32>
    %9 = arith.mulf %7, %8 : vector<8x1xf32>
    %10 = vector.broadcast %5 : vector<8x1xf32> to vector<8x256xf32>
    %11 = arith.subf %0, %10 : vector<8x256xf32>
    %12 = vector.broadcast %9 : vector<8x1xf32> to vector<8x256xf32>
    %13 = arith.subf %1, %12 : vector<8x256xf32>
    %14 = arith.mulf %11, %11 : vector<8x256xf32>
    %cst_6 = arith.constant dense<0.000000e+00> : vector<8xf32>
    %15 = vector.multi_reduction <add>, %14, %cst_6 [1] : vector<8x256xf32> to vector<8xf32>
    %16 = vector.shape_cast %15 : vector<8xf32> to vector<8x1xf32>
    %cst_7 = arith.constant 0.00392156886 : f32
    %17 = vector.broadcast %cst_7 : f32 to vector<8x1xf32>
    %18 = arith.mulf %16, %17 : vector<8x1xf32>
    %19 = arith.mulf %13, %13 : vector<8x256xf32>
    %cst_8 = arith.constant dense<0.000000e+00> : vector<8xf32>
    %20 = vector.multi_reduction <add>, %19, %cst_8 [1] : vector<8x256xf32> to vector<8xf32>
    %21 = vector.shape_cast %20 : vector<8xf32> to vector<8x1xf32>
    %cst_9 = arith.constant 0.00392156886 : f32
    %22 = vector.broadcast %cst_9 : f32 to vector<8x1xf32>
    %23 = arith.mulf %21, %22 : vector<8x1xf32>
    %24 = math.sqrt %18 : vector<8x1xf32>
    %25 = math.sqrt %23 : vector<8x1xf32>
    %cst_10 = arith.constant 9.99999974E-6 : f32
    %26 = vector.broadcast %cst_10 : f32 to vector<8x1xf32>
    %27 = arith.addf %24, %26 : vector<8x1xf32>
    %28 = arith.divf %25, %27 : vector<8x1xf32>
    %cst_11 = arith.constant 0.699999988 : f32
    %29 = vector.broadcast %cst_11 : f32 to vector<8x1xf32>
    %30 = arith.mulf %29, %28 : vector<8x1xf32>
    %cst_12 = arith.constant 3.000000e-01 : f32
    %31 = vector.broadcast %cst_12 : f32 to vector<8x1xf32>
    %32 = arith.addf %31, %30 : vector<8x1xf32>
    %33 = arith.mulf %5, %28 : vector<8x1xf32>
    %34 = arith.subf %9, %33 : vector<8x1xf32>
    %cst_13 = arith.constant 0.699999988 : f32
    %35 = vector.broadcast %cst_13 : f32 to vector<8x1xf32>
    %36 = arith.mulf %35, %34 : vector<8x1xf32>
    %37 = vector.broadcast %32 : vector<8x1xf32> to vector<8x256xf32>
    %38 = arith.mulf %37, %0 : vector<8x256xf32>
    %39 = vector.broadcast %36 : vector<8x1xf32> to vector<8x256xf32>
    %40 = arith.addf %38, %39 : vector<8x256xf32>
    %c0_14 = arith.constant 0 : index
    %c0_15 = arith.constant 0 : index
    %41 = vector.load %arg3[%c0_14, %c0_15] : memref<8x256xf32, #tpu.memory_space<vmem>>, vector<8x256xf32>
    tpu.vector_store %arg3[%c0_14, %c0_15], %40 {strides = array<i32>} : memref<8x256xf32, #tpu.memory_space<vmem>>, vector<8x256xf32>,
    return
  }
  func.func @transform_0(%arg0: i32) -> (i32, i32) {
    %c0_i32 = arith.constant 0 : i32
    %c0_i32_0 = arith.constant 0 : i32
    return %arg0, %c0_i32 : i32, i32
  }
  func.func @transform_1(%arg0: i32) -> (i32, i32) {
    %c0_i32 = arith.constant 0 : i32
    %c0_i32_0 = arith.constant 0 : i32
    return %arg0, %c0_i32 : i32, i32
  }
  func.func @transform_2(%arg0: i32) -> (i32, i32) {
    %c0_i32 = arith.constant 0 : i32
    %c0_i32_0 = arith.constant 0 : i32
    return %arg0, %c0_i32 : i32, i32
  }
}

</mosaic_0001>

<llo_original>
// kernel: tpu_custom_call.1
$region0: #{tpu_custom_call.1}
  #allocation0 [shape = 'u32[]', space=smem, size = 0x4, offset = 0x4, fixed_abs, tag = 'smem constant byte address 0x4 - core index']
  #allocation1 [shape = 'u32[144,128]{1,0:T(1,128)}', space=vmem, size = 0x12000, scoped, tag = 'internal scratch']
  %s0 = inlined_call_operand.hbm [shape: f32[8,256], index: 0, kind: input, shape index: {}]
  %s1 = inlined_call_operand.hbm [shape: f32[8,256], index: 1, kind: input, shape index: {}]
  %s2 = inlined_call_operand.hbm [shape: f32[8,256], index: 2, kind: output, shape index: {}]
  %s3 = sld [smem:[#allocation0]]
  $region26: #{tpu_custom_call.1} parent=0
    _
  %s5 = ssub.s32 1, %s3
  %s6 = scalar_select 0, %s5, %s3
  $region1: #{tpu_custom_call.1} parent=0
    #allocation2 [shape = 'u8[8192]{0}', space=vmem, size = 0x2000, scoped, tag = 'input window, operand 0, single buffered']
    #allocation3 [shape = 's32[1]{0}', space=sflag, size = 0x4, scoped, tag = 'scoped memory for tpu_custom_call.1']
    #allocation4 [shape = 's32[1]{0}', space=sflag, size = 0x4, scoped, tag = 'scoped memory for tpu_custom_call.1']
    #allocation5 [shape = 'u8[8192]{0}', space=vmem, size = 0x2000, scoped, tag = 'input window, operand 1, single buffered']
    #allocation6 [shape = 's32[1]{0}', space=sflag, size = 0x4, scoped, tag = 'scoped memory for tpu_custom_call.1']
    #allocation7 [shape = 'u8[8192]{0}', space=vmem, size = 0x2000, scoped, tag = 'output window, operand 0, single buffered']
    %7 = vsyncpa [#allocation3], 0
    %8 = vsyncpa [#allocation6], 0
    %9 = vsyncpa [#allocation4], 0
    // Predicated region
    $region2: #{tpu_custom_call.1} parent=1 // pred_check
      _
    $region3: #{tpu_custom_call.1} parent=1 // pred_check_branch
      %11 = sbr.rel (0) target = $region5
    $region4: #{tpu_custom_call.1} parent=1 // pred_region
      %s13 = ssub.s32 256, 256
      %14 = vsyncadd [#allocation3], %s13
      %s16 = sshll.u32 [#allocation2], 4
      %s17 = int_to_ptr.vmem [resolvable:$true] %s16
      %19 = dma.hbm_to_vmem [thread:$0]  %s0, 256, %s17, [#allocation3]
    $region5: #{tpu_custom_call.1} parent=1 // pred_fallthru
      _
    // Predicated region
    $region6: #{tpu_custom_call.1} parent=1 // pred_check
      _
    $region7: #{tpu_custom_call.1} parent=1 // pred_check_branch
      %21 = sbr.rel (0) target = $region9
    $region8: #{tpu_custom_call.1} parent=1 // pred_region
      %s23 = ssub.s32 256, 256
      %24 = vsyncadd [#allocation6], %s23
      %s26 = sshll.u32 [#allocation5], 4
      %s27 = int_to_ptr.vmem [resolvable:$true] %s26
      %29 = dma.hbm_to_vmem [thread:$0]  %s1, 256, %s27, [#allocation6]
    $region9: #{tpu_custom_call.1} parent=1 // pred_fallthru
      _
    // Predicated region
    $region10: #{tpu_custom_call.1} parent=1 // pred_check
      _
    $region11: #{tpu_custom_call.1} parent=1 // pred_check_branch
      %31 = sbr.rel (0) target = $region13
    $region12: #{tpu_custom_call.1} parent=1 // pred_region
      %32 = dma.done [#allocation3], 256
    $region13: #{tpu_custom_call.1} parent=1 // pred_fallthru
      _
    // Predicated region
    $region14: #{tpu_custom_call.1} parent=1 // pred_check
      _
    $region15: #{tpu_custom_call.1} parent=1 // pred_check_branch
      %34 = sbr.rel (0) target = $region17
    $region16: #{tpu_custom_call.1} parent=1 // pred_region
      %35 = dma.done [#allocation6], 256
    $region17: #{tpu_custom_call.1} parent=1 // pred_fallthru
      _
    %v36 = vld [vmem:[#allocation2] sm:$0xff]
    %v37 = vld [vmem:[#allocation2 + $0x8] sm:$0xff]
    %v38 = vld [vmem:[#allocation5] sm:$0xff]
    %v39 = vld [vmem:[#allocation5 + $0x8] sm:$0xff]
    %v40 = vadd.f32 %v36, %v37
    %41 = vadd.xlane.f32.xlu0 %v40
    %v42 = vpop.xlane.xlu0 %41
    %v43 = vmul.f32 %v42, 0.00390625
    %v44 = vadd.f32 %v38, %v39
    %45 = vadd.xlane.f32.xlu0 %v44
    %v46 = vpop.xlane.xlu0 %45
    %v47 = vmul.f32 %v46, 0.00390625
    %v48 = vsub.f32 %v36, %v43
    %v49 = vsub.f32 %v37, %v43
    %v50 = vsub.f32 %v38, %v47
    %v51 = vsub.f32 %v39, %v47
    %v52 = vmul.f32 %v48, %v48
    %v53 = vmul.f32 %v49, %v49
    %v54 = vadd.f32 %v52, %v53
    %55 = vadd.xlane.f32.xlu0 %v54
    %v56 = vpop.xlane.xlu0 %55
    %v57 = vmul.f32 %v56, 0.003921569
    %v58 = vmul.f32 %v50, %v50
    %v59 = vmul.f32 %v51, %v51
    %v60 = vadd.f32 %v58, %v59
    %61 = vadd.xlane.f32.xlu0 %v60
    %v62 = vpop.xlane.xlu0 %61
    %v63 = vmul.f32 %v62, 0.003921569
    %v64 = vrsqrt.pop %v57
    %v65 = vmul.f32 %v57, %v64
    %vm66 = vcmp.eq.f32.partialorder %v57, inf
    %v67 = vsel %vm66, %v57, %v65
    %vm68 = vcmp.eq.f32.partialorder %v57, 0.0
    %v69 = vand.u32 %v57, 2147483648
    %v70 = vsel %vm68, %v69, %v67
    %v71 = vrsqrt.pop %v63
    %v72 = vmul.f32 %v63, %v71
    %vm73 = vcmp.eq.f32.partialorder %v63, inf
    %v74 = vsel %vm73, %v63, %v72
    %vm75 = vcmp.eq.f32.partialorder %v63, 0.0
    %v76 = vand.u32 %v63, 2147483648
    %v77 = vsel %vm75, %v76, %v74
    %v78 = vadd.f32 %v70, 1e-05
    %v79 = vrcp.pop %v78
    %v80 = vmul.f32 %v77, %v79
    %v81 = vmul.f32 %v80, 0.7
    %v82 = vadd.f32 %v81, 0.3
    %v83 = vmul.f32 %v43, %v80
    %v84 = vsub.f32 %v47, %v83
    %v85 = vmul.f32 %v84, 0.7
    %v86 = vmul.f32 %v82, %v36
    %v87 = vmul.f32 %v82, %v37
    %v88 = vadd.f32 %v86, %v85
    %v89 = vadd.f32 %v87, %v85
    %90 = vst [vmem:[#allocation7] sm:$0xff] %v88
    %91 = vst [vmem:[#allocation7 + $0x8] sm:$0xff] %v89
    // Predicated region
    $region18: #{tpu_custom_call.1} parent=1 // pred_check
      _
    $region19: #{tpu_custom_call.1} parent=1 // pred_check_branch
      %93 = sbr.rel (0) target = $region21
    $region20: #{tpu_custom_call.1} parent=1 // pred_region
      %s95 = ssub.s32 256, 256
      %96 = vsyncadd [#allocation4], %s95
      %s98 = sshll.u32 [#allocation7], 4
      %s99 = int_to_ptr.vmem [resolvable:$true] %s98
      %101 = dma.vmem_to_hbm [thread:$0]  %s99, 256, %s2, [#allocation4]
    $region21: #{tpu_custom_call.1} parent=1 // pred_fallthru
      _
    // Predicated region
    $region22: #{tpu_custom_call.1} parent=1 // pred_check
      _
    $region23: #{tpu_custom_call.1} parent=1 // pred_check_branch
      %103 = sbr.rel (0) target = $region25
    $region24: #{tpu_custom_call.1} parent=1 // pred_region
      %104 = dma.done [#allocation4], 256
    $region25: #{tpu_custom_call.1} parent=1 // pred_fallthru
      _
    %105 = vsyncpa [#allocation3], 1
    %106 = vsyncpa [#allocation6], 1
    %107 = vsyncpa [#allocation4], 1

</llo_original>
